<compile_context>
chip_gen: v7x
topology: tpu7x:2x2x1
jax: 0.10.0
libtpu: 0.0.40
codegen_flags: <defaults>
</compile_context>

<pallas_src>
import functools

import jax
import jax.numpy as jnp
from jax import lax
from jax.experimental import pallas as pl
from jax.experimental.pallas import tpu as pltpu

LANE = 128
MAX_BLOCK_ROWS = 1024   # 7 streams * 2 buffers * 1024*128*4B = 7 MiB pipeline VMEM
NCORES = 2              # per-core partial accumulators (v7x megacore; cheap elsewhere)


def _cdiv(a, b):
    return (a + b - 1) // b


def _round_up(x, m):
    return _cdiv(x, m) * m


def _make_kernel(block_rows, per_core_blocks, total_rows, need_mask):
    n_sub = block_rows // 8

    def kernel(p1_ref, p2_ref, p3_ref, p4_ref, p5_ref, pc_ref, t_ref,
               st_ref, s1mt_ref, pos_ref):
        # st/s1mt/pos refs: (8, 128) f32 per-core accumulators, VMEM-resident
        # across the "arbitrary" grid axis.
        @pl.when(pl.program_id(1) == 0)
        def _():
            st_ref[...] = jnp.zeros_like(st_ref)
            s1mt_ref[...] = jnp.zeros_like(s1mt_ref)
            pos_ref[...] = jnp.zeros_like(pos_ref)

        t = t_ref[...]
        one_m_t = 1.0 - t

        # L(e) = sum over six predictions of t*log(p) + (1-t)*log(1-p),
        # with the same -100 clamp F.binary_cross_entropy applies.
        log_sum = jnp.zeros_like(t)
        for p_ref in (p1_ref, p2_ref, p3_ref, p4_ref, p5_ref, pc_ref):
            p = p_ref[...]
            log_p = jnp.maximum(jnp.log(p), -100.0)
            log_1mp = jnp.maximum(jnp.log(1.0 - p), -100.0)
            log_sum = log_sum + (t * log_p + one_m_t * log_1mp)
        # TODO(synk): for strictly-binary targets a single log per prediction
        # (log(where(t>0.5, p, 1-p))) would halve EUP work; kept exact instead.

        s_t = t * log_sum
        s_1mt = one_m_t * log_sum
        pos = t

        if need_mask:
            # Zero rows of grid coverage beyond the real array (ragged last
            # block and/or the duplicated clamped block of the other core).
            blk = pl.program_id(0) * per_core_blocks + pl.program_id(1)
            row0 = blk * block_rows
            row_ids = lax.broadcasted_iota(jnp.int32, (block_rows, LANE), 0) + row0
            valid = row_ids < total_rows
            zero = jnp.zeros_like(t)
            s_t = jnp.where(valid, s_t, zero)
            s_1mt = jnp.where(valid, s_1mt, zero)
            pos = jnp.where(valid, pos, zero)

        # Per-vreg (VPU) accumulation; final cross-lane reduce happens in JAX.
        st_ref[...] += s_t.reshape(n_sub, 8, LANE).sum(axis=0)
        s1mt_ref[...] += s_1mt.reshape(n_sub, 8, LANE).sum(axis=0)
        pos_ref[...] += pos.reshape(n_sub, 8, LANE).sum(axis=0)

    return kernel


def _to_slab(x):
    """Flatten to (rows, 128) f32.  Pads at most 127 elements; zero padding is
    exactly neutral for every accumulated sum (t=0, log(1-0)=0)."""
    flat = x.reshape(-1).astype(jnp.float32)
    pad = (-flat.size) % LANE
    if pad:
        flat = jnp.pad(flat, (0, pad))
    return flat.reshape(-1, LANE)


def _partial_sums(preds2d, t2d):
    rows = t2d.shape[0]
    block_rows = min(MAX_BLOCK_ROWS, _round_up(rows, 8))
    num_blocks = _cdiv(rows, block_rows)
    per_core = _cdiv(num_blocks, NCORES)
    need_mask = NCORES * per_core * block_rows > rows

    def in_map(c, i):
        # Clamp so ragged / duplicated coverage re-reads the last real block;
        # its contribution is masked to zero inside the kernel.
        return (jnp.minimum(c * per_core + i, num_blocks - 1), 0)

    tile_spec = pl.BlockSpec((block_rows, LANE), in_map)
    acc_spec = pl.BlockSpec((None, 8, LANE), lambda c, i: (c, 0, 0))
    acc_shape = jax.ShapeDtypeStruct((NCORES, 8, LANE), jnp.float32)

    kernel = _make_kernel(block_rows, per_core, rows, need_mask)

    st, s1mt, pos = pl.pallas_call(
        kernel,
        out_shape=(acc_shape, acc_shape, acc_shape),
        grid_spec=pltpu.PrefetchScalarGridSpec(
            num_scalar_prefetch=0,
            grid=(NCORES, per_core),
            in_specs=[tile_spec] * 7,            # 6 preds + target
            out_specs=[acc_spec, acc_spec, acc_spec],
        ),
        compiler_params=pltpu.CompilerParams(
            dimension_semantics=("parallel", "arbitrary"),
            vmem_limit_bytes=32 * 1024 * 1024,
        ),
    )(*preds2d, t2d)

    return jnp.sum(st), jnp.sum(s1mt), jnp.sum(pos)


@functools.partial(jax.jit, static_argnames=("reduction",))
def balanced_bce_loss_ds(pred1, pred2, pred3, pred4, pred5, predc, target,
                         reduction="mean"):
    assert reduction == "mean"  # TODO(synk): only 'mean' reduction implemented
    n_elems = target.size

    t2d = _to_slab(target)
    preds2d = [_to_slab(p) for p in (pred1, pred2, pred3, pred4, pred5, predc)]

    s_t, s_1mt, pos = _partial_sums(preds2d, t2d)
    neg = jnp.float32(n_elems) - pos
    beta = neg / (neg + pos)
    # weight = t*beta + (1-t)*(1-beta)  =>  sum_i bce_i = -(beta*S_t + (1-beta)*S_1mt)
    total = -(beta * s_t + (1.0 - beta) * s_1mt)
    # Each of the six losses is a mean over n_elems; their sum is the grand
    # weighted sum divided by n_elems.
    return total / jnp.float32(n_elems)


def _reference(pred1, pred2, pred3, pred4, pred5, predc, target):
    """Pure-JAX reference mirroring the PyTorch module."""
    target = target.astype(jnp.float32)
    neg = jnp.sum(1.0 - target)
    pos = jnp.sum(target)
    beta = neg / (neg + pos)
    weight = target * beta + (1.0 - target) * (1.0 - beta)

    def bce(p):
        p = p.astype(jnp.float32)
        lp = jnp.maximum(jnp.log(p), -100.0)
        l1mp = jnp.maximum(jnp.log(1.0 - p), -100.0)
        return jnp.mean(-weight * (target * lp + (1.0 - target) * l1mp))

    return bce(pred1) + bce(pred2) + bce(pred3) + bce(pred4) + bce(pred5) + bce(predc)


if __name__ == "__main__":
    key = jax.random.PRNGKey(0)
    shape = (2, 4, 16, 16)  # NCHW

    keys = jax.random.split(key, 7)
    # Predictions are probabilities in (0, 1) (outputs of a sigmoid in HED).
    preds = [jax.nn.sigmoid(jax.random.normal(k, shape, jnp.float32))
             for k in keys[:6]]
    # Binary edge target.
    target = (jax.random.uniform(keys[6], shape) < 0.3).astype(jnp.float32)

    loss = balanced_bce_loss_ds(*preds, target)
    loss = jax.block_until_ready(loss)

    ref = _reference(*preds, target)
    assert jnp.allclose(loss, ref, rtol=1e-5, atol=1e-5), (loss, ref)

    print("KERNEL_OK")
</pallas_src>

<mosaic_0001>
module attributes {stable_mosaic.version = 11 : i64} {
  func.func @kernel(%arg0: i32, %arg1: i32, %arg2: memref<16x128xf32, #tpu.memory_space<vmem>>, %arg3: memref<16x128xf32, #tpu.memory_space<vmem>>, %arg4: memref<16x128xf32, #tpu.memory_space<vmem>>, %arg5: memref<16x128xf32, #tpu.memory_space<vmem>>, %arg6: memref<16x128xf32, #tpu.memory_space<vmem>>, %arg7: memref<16x128xf32, #tpu.memory_space<vmem>>, %arg8: memref<16x128xf32, #tpu.memory_space<vmem>>, %arg9: memref<1x8x128xf32, #tpu.memory_space<vmem>>, %arg10: memref<1x8x128xf32, #tpu.memory_space<vmem>>, %arg11: memref<1x8x128xf32, #tpu.memory_space<vmem>>) attributes {dimension_semantics = [#tpu.dimension_semantics<parallel>, #tpu.dimension_semantics<arbitrary>], iteration_bounds = array<i64: 2, 1>, scalar_prefetch = 0 : i64, scratch_operands = 0 : i64, tpu.core_type = #tpu.core_type<tc>, window_params = [{transform_indices = @transform_0, window_bounds = array<i64: 16, 128>}, {transform_indices = @transform_1, window_bounds = array<i64: 16, 128>}, {transform_indices = @transform_2, window_bounds = array<i64: 16, 128>}, {transform_indices = @transform_3, window_bounds = array<i64: 16, 128>}, {transform_indices = @transform_4, window_bounds = array<i64: 16, 128>}, {transform_indices = @transform_5, window_bounds = array<i64: 16, 128>}, {transform_indices = @transform_6, window_bounds = array<i64: 16, 128>}, {transform_indices = @transform_7, window_bounds = array<i64: 1, 8, 128>}, {transform_indices = @transform_8, window_bounds = array<i64: 1, 8, 128>}, {transform_indices = @transform_9, window_bounds = array<i64: 1, 8, 128>}]} {
    %c0_i32 = arith.constant 0 : i32
    %0 = arith.cmpi eq, %arg1, %c0_i32 : i32
    %1 = arith.extui %0 : i1 to i32
    %c0_i32_0 = arith.constant 0 : i32
    %2 = arith.cmpi ne, %1, %c0_i32_0 : i32
    scf.if %2 {
      %cst_56 = arith.constant 0.000000e+00 : f32
      %123 = vector.broadcast %cst_56 : f32 to vector<8x128xf32>
      %c0_57 = arith.constant 0 : index
      %c0_58 = arith.constant 0 : index
      %c0_59 = arith.constant 0 : index
      %124 = vector.load %arg9[%c0_57, %c0_58, %c0_59] : memref<1x8x128xf32, #tpu.memory_space<vmem>>, vector<1x8x128xf32>
      %125 = vector.shape_cast %124 : vector<1x8x128xf32> to vector<8x128xf32>
      %126 = vector.shape_cast %123 : vector<8x128xf32> to vector<1x8x128xf32>
      tpu.vector_store %arg9[%c0_57, %c0_58, %c0_59], %126 {strides = array<i32>} : memref<1x8x128xf32, #tpu.memory_space<vmem>>, vector<1x8x128xf32>,
      %cst_60 = arith.constant 0.000000e+00 : f32
      %127 = vector.broadcast %cst_60 : f32 to vector<8x128xf32>
      %c0_61 = arith.constant 0 : index
      %c0_62 = arith.constant 0 : index
      %c0_63 = arith.constant 0 : index
      %128 = vector.load %arg10[%c0_61, %c0_62, %c0_63] : memref<1x8x128xf32, #tpu.memory_space<vmem>>, vector<1x8x128xf32>
      %129 = vector.shape_cast %128 : vector<1x8x128xf32> to vector<8x128xf32>
      %130 = vector.shape_cast %127 : vector<8x128xf32> to vector<1x8x128xf32>
      tpu.vector_store %arg10[%c0_61, %c0_62, %c0_63], %130 {strides = array<i32>} : memref<1x8x128xf32, #tpu.memory_space<vmem>>, vector<1x8x128xf32>,
      %cst_64 = arith.constant 0.000000e+00 : f32
      %131 = vector.broadcast %cst_64 : f32 to vector<8x128xf32>
      %c0_65 = arith.constant 0 : index
      %c0_66 = arith.constant 0 : index
      %c0_67 = arith.constant 0 : index
      %132 = vector.load %arg11[%c0_65, %c0_66, %c0_67] : memref<1x8x128xf32, #tpu.memory_space<vmem>>, vector<1x8x128xf32>
      %133 = vector.shape_cast %132 : vector<1x8x128xf32> to vector<8x128xf32>
      %134 = vector.shape_cast %131 : vector<8x128xf32> to vector<1x8x128xf32>
      tpu.vector_store %arg11[%c0_65, %c0_66, %c0_67], %134 {strides = array<i32>} : memref<1x8x128xf32, #tpu.memory_space<vmem>>, vector<1x8x128xf32>,
    } else {
    }
    %c0 = arith.constant 0 : index
    %c0_1 = arith.constant 0 : index
    %3 = vector.load %arg8[%c0, %c0_1] : memref<16x128xf32, #tpu.memory_space<vmem>>, vector<16x128xf32>
    %cst = arith.constant 1.000000e+00 : f32
    %4 = vector.broadcast %cst : f32 to vector<16x128xf32>
    %5 = arith.subf %4, %3 : vector<16x128xf32>
    %cst_2 = arith.constant 0.000000e+00 : f32
    %6 = vector.broadcast %cst_2 : f32 to vector<16x128xf32>
    %c0_3 = arith.constant 0 : index
    %c0_4 = arith.constant 0 : index
    %7 = vector.load %arg2[%c0_3, %c0_4] : memref<16x128xf32, #tpu.memory_space<vmem>>, vector<16x128xf32>
    %8 = math.log %7 : vector<16x128xf32>
    %cst_5 = arith.constant -1.000000e+02 : f32
    %9 = vector.broadcast %cst_5 : f32 to vector<16x128xf32>
    %10 = arith.maximumf %8, %9 : vector<16x128xf32>
    %cst_6 = arith.constant 1.000000e+00 : f32
    %11 = vector.broadcast %cst_6 : f32 to vector<16x128xf32>
    %12 = arith.subf %11, %7 : vector<16x128xf32>
    %13 = math.log %12 : vector<16x128xf32>
    %cst_7 = arith.constant -1.000000e+02 : f32
    %14 = vector.broadcast %cst_7 : f32 to vector<16x128xf32>
    %15 = arith.maximumf %13, %14 : vector<16x128xf32>
    %16 = arith.mulf %3, %10 : vector<16x128xf32>
    %17 = arith.mulf %5, %15 : vector<16x128xf32>
    %18 = arith.addf %16, %17 : vector<16x128xf32>
    %19 = arith.addf %6, %18 : vector<16x128xf32>
    %c0_8 = arith.constant 0 : index
    %c0_9 = arith.constant 0 : index
    %20 = vector.load %arg3[%c0_8, %c0_9] : memref<16x128xf32, #tpu.memory_space<vmem>>, vector<16x128xf32>
    %21 = math.log %20 : vector<16x128xf32>
    %cst_10 = arith.constant -1.000000e+02 : f32
    %22 = vector.broadcast %cst_10 : f32 to vector<16x128xf32>
    %23 = arith.maximumf %21, %22 : vector<16x128xf32>
    %cst_11 = arith.constant 1.000000e+00 : f32
    %24 = vector.broadcast %cst_11 : f32 to vector<16x128xf32>
    %25 = arith.subf %24, %20 : vector<16x128xf32>
    %26 = math.log %25 : vector<16x128xf32>
    %cst_12 = arith.constant -1.000000e+02 : f32
    %27 = vector.broadcast %cst_12 : f32 to vector<16x128xf32>
    %28 = arith.maximumf %26, %27 : vector<16x128xf32>
    %29 = arith.mulf %3, %23 : vector<16x128xf32>
    %30 = arith.mulf %5, %28 : vector<16x128xf32>
    %31 = arith.addf %29, %30 : vector<16x128xf32>
    %32 = arith.addf %19, %31 : vector<16x128xf32>
    %c0_13 = arith.constant 0 : index
    %c0_14 = arith.constant 0 : index
    %33 = vector.load %arg4[%c0_13, %c0_14] : memref<16x128xf32, #tpu.memory_space<vmem>>, vector<16x128xf32>
    %34 = math.log %33 : vector<16x128xf32>
    %cst_15 = arith.constant -1.000000e+02 : f32
    %35 = vector.broadcast %cst_15 : f32 to vector<16x128xf32>
    %36 = arith.maximumf %34, %35 : vector<16x128xf32>
    %cst_16 = arith.constant 1.000000e+00 : f32
    %37 = vector.broadcast %cst_16 : f32 to vector<16x128xf32>
    %38 = arith.subf %37, %33 : vector<16x128xf32>
    %39 = math.log %38 : vector<16x128xf32>
    %cst_17 = arith.constant -1.000000e+02 : f32
    %40 = vector.broadcast %cst_17 : f32 to vector<16x128xf32>
    %41 = arith.maximumf %39, %40 : vector<16x128xf32>
    %42 = arith.mulf %3, %36 : vector<16x128xf32>
    %43 = arith.mulf %5, %41 : vector<16x128xf32>
    %44 = arith.addf %42, %43 : vector<16x128xf32>
    %45 = arith.addf %32, %44 : vector<16x128xf32>
    %c0_18 = arith.constant 0 : index
    %c0_19 = arith.constant 0 : index
    %46 = vector.load %arg5[%c0_18, %c0_19] : memref<16x128xf32, #tpu.memory_space<vmem>>, vector<16x128xf32>
    %47 = math.log %46 : vector<16x128xf32>
    %cst_20 = arith.constant -1.000000e+02 : f32
    %48 = vector.broadcast %cst_20 : f32 to vector<16x128xf32>
    %49 = arith.maximumf %47, %48 : vector<16x128xf32>
    %cst_21 = arith.constant 1.000000e+00 : f32
    %50 = vector.broadcast %cst_21 : f32 to vector<16x128xf32>
    %51 = arith.subf %50, %46 : vector<16x128xf32>
    %52 = math.log %51 : vector<16x128xf32>
    %cst_22 = arith.constant -1.000000e+02 : f32
    %53 = vector.broadcast %cst_22 : f32 to vector<16x128xf32>
    %54 = arith.maximumf %52, %53 : vector<16x128xf32>
    %55 = arith.mulf %3, %49 : vector<16x128xf32>
    %56 = arith.mulf %5, %54 : vector<16x128xf32>
    %57 = arith.addf %55, %56 : vector<16x128xf32>
    %58 = arith.addf %45, %57 : vector<16x128xf32>
    %c0_23 = arith.constant 0 : index
    %c0_24 = arith.constant 0 : index
    %59 = vector.load %arg6[%c0_23, %c0_24] : memref<16x128xf32, #tpu.memory_space<vmem>>, vector<16x128xf32>
    %60 = math.log %59 : vector<16x128xf32>
    %cst_25 = arith.constant -1.000000e+02 : f32
    %61 = vector.broadcast %cst_25 : f32 to vector<16x128xf32>
    %62 = arith.maximumf %60, %61 : vector<16x128xf32>
    %cst_26 = arith.constant 1.000000e+00 : f32
    %63 = vector.broadcast %cst_26 : f32 to vector<16x128xf32>
    %64 = arith.subf %63, %59 : vector<16x128xf32>
    %65 = math.log %64 : vector<16x128xf32>
    %cst_27 = arith.constant -1.000000e+02 : f32
    %66 = vector.broadcast %cst_27 : f32 to vector<16x128xf32>
    %67 = arith.maximumf %65, %66 : vector<16x128xf32>
    %68 = arith.mulf %3, %62 : vector<16x128xf32>
    %69 = arith.mulf %5, %67 : vector<16x128xf32>
    %70 = arith.addf %68, %69 : vector<16x128xf32>
    %71 = arith.addf %58, %70 : vector<16x128xf32>
    %c0_28 = arith.constant 0 : index
    %c0_29 = arith.constant 0 : index
    %72 = vector.load %arg7[%c0_28, %c0_29] : memref<16x128xf32, #tpu.memory_space<vmem>>, vector<16x128xf32>
    %73 = math.log %72 : vector<16x128xf32>
    %cst_30 = arith.constant -1.000000e+02 : f32
    %74 = vector.broadcast %cst_30 : f32 to vector<16x128xf32>
    %75 = arith.maximumf %73, %74 : vector<16x128xf32>
    %cst_31 = arith.constant 1.000000e+00 : f32
    %76 = vector.broadcast %cst_31 : f32 to vector<16x128xf32>
    %77 = arith.subf %76, %72 : vector<16x128xf32>
    %78 = math.log %77 : vector<16x128xf32>
    %cst_32 = arith.constant -1.000000e+02 : f32
    %79 = vector.broadcast %cst_32 : f32 to vector<16x128xf32>
    %80 = arith.maximumf %78, %79 : vector<16x128xf32>
    %81 = arith.mulf %3, %75 : vector<16x128xf32>
    %82 = arith.mulf %5, %80 : vector<16x128xf32>
    %83 = arith.addf %81, %82 : vector<16x128xf32>
    %84 = arith.addf %71, %83 : vector<16x128xf32>
    %85 = arith.mulf %3, %84 : vector<16x128xf32>
    %86 = arith.mulf %5, %84 : vector<16x128xf32>
    %c1_i32 = arith.constant 1 : i32
    %87 = arith.muli %arg0, %c1_i32 : i32
    %88 = arith.addi %87, %arg1 : i32
    %c16_i32 = arith.constant 16 : i32
    %89 = arith.muli %88, %c16_i32 : i32
    %90 = tpu.iota {dimensions = array<i32: 0>} : vector<16x128xi32>
    %91 = vector.broadcast %89 : i32 to vector<16x128xi32>
    %92 = arith.addi %90, %91 : vector<16x128xi32>
    %c16_i32_33 = arith.constant 16 : i32
    %93 = vector.broadcast %c16_i32_33 : i32 to vector<16x128xi32>
    %94 = arith.cmpi slt, %92, %93 : vector<16x128xi32>
    %cst_34 = arith.constant 0.000000e+00 : f32
    %95 = vector.broadcast %cst_34 : f32 to vector<16x128xf32>
    %96 = arith.select %94, %85, %95 : vector<16x128xi1>, vector<16x128xf32>
    %97 = arith.select %94, %86, %95 : vector<16x128xi1>, vector<16x128xf32>
    %98 = arith.select %94, %3, %95 : vector<16x128xi1>, vector<16x128xf32>
    %c0_35 = arith.constant 0 : index
    %c0_36 = arith.constant 0 : index
    %c0_37 = arith.constant 0 : index
    %99 = vector.load %arg9[%c0_35, %c0_36, %c0_37] : memref<1x8x128xf32, #tpu.memory_space<vmem>>, vector<1x8x128xf32>
    %100 = vector.shape_cast %99 : vector<1x8x128xf32> to vector<8x128xf32>
    %101 = vector.shape_cast %96 : vector<16x128xf32> to vector<2x8x128xf32>
    %cst_38 = arith.constant dense<0.000000e+00> : vector<8x128xf32>
    %102 = vector.multi_reduction <add>, %101, %cst_38 [0] : vector<2x8x128xf32> to vector<8x128xf32>
    %103 = arith.addf %100, %102 : vector<8x128xf32>
    %c0_39 = arith.constant 0 : index
    %c0_40 = arith.constant 0 : index
    %c0_41 = arith.constant 0 : index
    %104 = vector.load %arg9[%c0_39, %c0_40, %c0_41] : memref<1x8x128xf32, #tpu.memory_space<vmem>>, vector<1x8x128xf32>
    %105 = vector.shape_cast %104 : vector<1x8x128xf32> to vector<8x128xf32>
    %106 = vector.shape_cast %103 : vector<8x128xf32> to vector<1x8x128xf32>
    tpu.vector_store %arg9[%c0_39, %c0_40, %c0_41], %106 {strides = array<i32>} : memref<1x8x128xf32, #tpu.memory_space<vmem>>, vector<1x8x128xf32>,
    %c0_42 = arith.constant 0 : index
    %c0_43 = arith.constant 0 : index
    %c0_44 = arith.constant 0 : index
    %107 = vector.load %arg10[%c0_42, %c0_43, %c0_44] : memref<1x8x128xf32, #tpu.memory_space<vmem>>, vector<1x8x128xf32>
    %108 = vector.shape_cast %107 : vector<1x8x128xf32> to vector<8x128xf32>
    %109 = vector.shape_cast %97 : vector<16x128xf32> to vector<2x8x128xf32>
    %cst_45 = arith.constant dense<0.000000e+00> : vector<8x128xf32>
    %110 = vector.multi_reduction <add>, %109, %cst_45 [0] : vector<2x8x128xf32> to vector<8x128xf32>
    %111 = arith.addf %108, %110 : vector<8x128xf32>
    %c0_46 = arith.constant 0 : index
    %c0_47 = arith.constant 0 : index
    %c0_48 = arith.constant 0 : index
    %112 = vector.load %arg10[%c0_46, %c0_47, %c0_48] : memref<1x8x128xf32, #tpu.memory_space<vmem>>, vector<1x8x128xf32>
    %113 = vector.shape_cast %112 : vector<1x8x128xf32> to vector<8x128xf32>
    %114 = vector.shape_cast %111 : vector<8x128xf32> to vector<1x8x128xf32>
    tpu.vector_store %arg10[%c0_46, %c0_47, %c0_48], %114 {strides = array<i32>} : memref<1x8x128xf32, #tpu.memory_space<vmem>>, vector<1x8x128xf32>,
    %c0_49 = arith.constant 0 : index
    %c0_50 = arith.constant 0 : index
    %c0_51 = arith.constant 0 : index
    %115 = vector.load %arg11[%c0_49, %c0_50, %c0_51] : memref<1x8x128xf32, #tpu.memory_space<vmem>>, vector<1x8x128xf32>
    %116 = vector.shape_cast %115 : vector<1x8x128xf32> to vector<8x128xf32>
    %117 = vector.shape_cast %98 : vector<16x128xf32> to vector<2x8x128xf32>
    %cst_52 = arith.constant dense<0.000000e+00> : vector<8x128xf32>
    %118 = vector.multi_reduction <add>, %117, %cst_52 [0] : vector<2x8x128xf32> to vector<8x128xf32>
    %119 = arith.addf %116, %118 : vector<8x128xf32>
    %c0_53 = arith.constant 0 : index
    %c0_54 = arith.constant 0 : index
    %c0_55 = arith.constant 0 : index
    %120 = vector.load %arg11[%c0_53, %c0_54, %c0_55] : memref<1x8x128xf32, #tpu.memory_space<vmem>>, vector<1x8x128xf32>
    %121 = vector.shape_cast %120 : vector<1x8x128xf32> to vector<8x128xf32>
    %122 = vector.shape_cast %119 : vector<8x128xf32> to vector<1x8x128xf32>
    tpu.vector_store %arg11[%c0_53, %c0_54, %c0_55], %122 {strides = array<i32>} : memref<1x8x128xf32, #tpu.memory_space<vmem>>, vector<1x8x128xf32>,
    return
  }
  func.func @transform_0(%arg0: i32, %arg1: i32) -> (i32, i32) {
    %c1_i32 = arith.constant 1 : i32
    %0 = arith.muli %arg0, %c1_i32 : i32
    %1 = arith.addi %0, %arg1 : i32
    %c0_i32 = arith.constant 0 : i32
    %2 = arith.minsi %1, %c0_i32 : i32
    %c0_i32_0 = arith.constant 0 : i32
    %c0_i32_1 = arith.constant 0 : i32
    return %2, %c0_i32_0 : i32, i32
  }
  func.func @transform_1(%arg0: i32, %arg1: i32) -> (i32, i32) {
    %c1_i32 = arith.constant 1 : i32
    %0 = arith.muli %arg0, %c1_i32 : i32
    %1 = arith.addi %0, %arg1 : i32
    %c0_i32 = arith.constant 0 : i32
    %2 = arith.minsi %1, %c0_i32 : i32
    %c0_i32_0 = arith.constant 0 : i32
    %c0_i32_1 = arith.constant 0 : i32
    return %2, %c0_i32_0 : i32, i32
  }
  func.func @transform_2(%arg0: i32, %arg1: i32) -> (i32, i32) {
    %c1_i32 = arith.constant 1 : i32
    %0 = arith.muli %arg0, %c1_i32 : i32
    %1 = arith.addi %0, %arg1 : i32
    %c0_i32 = arith.constant 0 : i32
    %2 = arith.minsi %1, %c0_i32 : i32
    %c0_i32_0 = arith.constant 0 : i32
    %c0_i32_1 = arith.constant 0 : i32
    return %2, %c0_i32_0 : i32, i32
  }
  func.func @transform_3(%arg0: i32, %arg1: i32) -> (i32, i32) {
    %c1_i32 = arith.constant 1 : i32
    %0 = arith.muli %arg0, %c1_i32 : i32
    %1 = arith.addi %0, %arg1 : i32
    %c0_i32 = arith.constant 0 : i32
    %2 = arith.minsi %1, %c0_i32 : i32
    %c0_i32_0 = arith.constant 0 : i32
    %c0_i32_1 = arith.constant 0 : i32
    return %2, %c0_i32_0 : i32, i32
  }
  func.func @transform_4(%arg0: i32, %arg1: i32) -> (i32, i32) {
    %c1_i32 = arith.constant 1 : i32
    %0 = arith.muli %arg0, %c1_i32 : i32
    %1 = arith.addi %0, %arg1 : i32
    %c0_i32 = arith.constant 0 : i32
    %2 = arith.minsi %1, %c0_i32 : i32
    %c0_i32_0 = arith.constant 0 : i32
    %c0_i32_1 = arith.constant 0 : i32
    return %2, %c0_i32_0 : i32, i32
  }
  func.func @transform_5(%arg0: i32, %arg1: i32) -> (i32, i32) {
    %c1_i32 = arith.constant 1 : i32
    %0 = arith.muli %arg0, %c1_i32 : i32
    %1 = arith.addi %0, %arg1 : i32
    %c0_i32 = arith.constant 0 : i32
    %2 = arith.minsi %1, %c0_i32 : i32
    %c0_i32_0 = arith.constant 0 : i32
    %c0_i32_1 = arith.constant 0 : i32
    return %2, %c0_i32_0 : i32, i32
  }
  func.func @transform_6(%arg0: i32, %arg1: i32) -> (i32, i32) {
    %c1_i32 = arith.constant 1 : i32
    %0 = arith.muli %arg0, %c1_i32 : i32
    %1 = arith.addi %0, %arg1 : i32
    %c0_i32 = arith.constant 0 : i32
    %2 = arith.minsi %1, %c0_i32 : i32
    %c0_i32_0 = arith.constant 0 : i32
    %c0_i32_1 = arith.constant 0 : i32
    return %2, %c0_i32_0 : i32, i32
  }
  func.func @transform_7(%arg0: i32, %arg1: i32) -> (i32, i32, i32) {
    %c0_i32 = arith.constant 0 : i32
    %c0_i32_0 = arith.constant 0 : i32
    %c0_i32_1 = arith.constant 0 : i32
    return %arg0, %c0_i32, %c0_i32_0 : i32, i32, i32
  }
  func.func @transform_8(%arg0: i32, %arg1: i32) -> (i32, i32, i32) {
    %c0_i32 = arith.constant 0 : i32
    %c0_i32_0 = arith.constant 0 : i32
    %c0_i32_1 = arith.constant 0 : i32
    return %arg0, %c0_i32, %c0_i32_0 : i32, i32, i32
  }
  func.func @transform_9(%arg0: i32, %arg1: i32) -> (i32, i32, i32) {
    %c0_i32 = arith.constant 0 : i32
    %c0_i32_0 = arith.constant 0 : i32
    %c0_i32_1 = arith.constant 0 : i32
    return %arg0, %c0_i32, %c0_i32_0 : i32, i32, i32
  }
}

</mosaic_0001>

<llo_original>
// kernel: balanced_bce_loss_ds.1
$region0: #{balanced_bce_loss_ds.1}
  #allocation0 [shape = 'u32[]', space=smem, size = 0x4, offset = 0x4, fixed_abs, tag = 'smem constant byte address 0x4 - core index']
  #allocation1 [shape = 'u32[144,128]{1,0:T(1,128)}', space=vmem, size = 0x12000, scoped, tag = 'internal scratch']
  %s0 = inlined_call_operand.vmem [shape: f32[16,128], index: 0, kind: input, shape index: {}]
  %s1 = inlined_call_operand.vmem [shape: f32[16,128], index: 1, kind: input, shape index: {}]
  %s2 = inlined_call_operand.vmem [shape: f32[16,128], index: 2, kind: input, shape index: {}]
  %s3 = inlined_call_operand.vmem [shape: f32[16,128], index: 3, kind: input, shape index: {}]
  %s4 = inlined_call_operand.vmem [shape: f32[16,128], index: 4, kind: input, shape index: {}]
  %s5 = inlined_call_operand.vmem [shape: f32[16,128], index: 5, kind: input, shape index: {}]
  %s6 = inlined_call_operand.vmem [shape: f32[16,128], index: 6, kind: input, shape index: {}]
  %s7 = inlined_call_operand.vmem [shape: f32[2,8,128], index: 7, kind: output, shape index: {0}]
  %s8 = inlined_call_operand.vmem [shape: f32[2,8,128], index: 8, kind: output, shape index: {1}]
  %s9 = inlined_call_operand.vmem [shape: f32[2,8,128], index: 9, kind: output, shape index: {2}]
  %10 = xla_tuple %s7, %s8, %s9
  %s11 = sld [smem:[#allocation0]]
  $region81: #{balanced_bce_loss_ds.1} parent=0
    _
  %s13 = ssub.s32 1, %s11
  %s14 = scalar_select 0, %s13, %s11
  loop: start=0, step=1, limit=4
  $region2: #{balanced_bce_loss_ds.1} parent=0 // loop_pre_header
    _
  $region3: #{balanced_bce_loss_ds.1} parent=0 // loop_header
    %s16 = sphi 0, %s20
    %p17 = scmp.ge.s32.totalorder %s16, 4
    %s23 = sphi 0, %s35
    %s24 = sphi 0, %s31
    %s25 = sphi 0, %s23
    %s26 = sphi 0, %s24
    %s27 = sphi 0, %s25
    %s28 = sphi 0, %s26
    %s44 = sphi 0, %s46
    %s47 = sphi 0, %s44
    %s48 = sphi 0, %s47
    %s64 = sphi 0, %s48
    %s76 = sphi 0, %s78
    %s79 = sphi 0, %s76
    %s80 = sphi 0, %s79
    %s96 = sphi 0, %s80
    %s108 = sphi 0, %s110
    %s111 = sphi 0, %s108
    %s112 = sphi 0, %s111
    %s128 = sphi 0, %s112
    %s140 = sphi 0, %s142
    %s143 = sphi 0, %s140
    %s144 = sphi 0, %s143
    %s160 = sphi 0, %s144
    %s172 = sphi 0, %s174
    %s175 = sphi 0, %s172
    %s176 = sphi 0, %s175
    %s192 = sphi 0, %s176
    %s204 = sphi 0, %s206
    %s207 = sphi 0, %s204
    %s208 = sphi 0, %s207
    %s224 = sphi 0, %s208
    %s236 = sphi 0, %s238
    %s239 = sphi 0, %s236
    %s240 = sphi 0, %s239
    %s256 = sphi 0, %s240
    %s262 = sphi 0, %s264
    %s265 = sphi 0, %s262
    %s266 = sphi 0, %s265
    %s282 = sphi 0, %s266
    %s288 = sphi 0, %s290
    %s291 = sphi 0, %s288
    %s292 = sphi 0, %s291
    %s308 = sphi 0, %s292
    %s314 = sphi 0, %s316
    %s317 = sphi 0, %s314
    %s318 = sphi 0, %s317
    %s334 = sphi 0, %s318
  $region4: #{balanced_bce_loss_ds.1} parent=0 // loop_header_branch
    %19 = sbr.rel (%p17) target = $region8
  $region5: #{balanced_bce_loss_ds.1} parent=0 // loop_body
    %s21 = ssub.s32 %s16, 1
    %s22 = ssub.s32 %s16, 2
    %s29 = sadd.s32 1, %s24
    %p30 = scmp.ge.s32.totalorder %s29, 1
    %s31 = scalar_select %p30, 0, %s29
    %s32 = sadd.s32 1, %s23
    %s33 = scalar_select %p30, %s32, %s23
    %p34 = scmp.ge.s32.totalorder %s33, 2
    %s35 = scalar_select %p34, 0, %s33
    %s36 = sadd.s32 %s23, %s24
    %p37 = scmp.lt.s32.totalorder %s36, 0
    %s38 = scalar_select %p37, %s36, 0
    %s39 = sadd.s32 %s35, %s31
    %p40 = scmp.lt.s32.totalorder %s39, 0
    %s41 = scalar_select %p40, %s39, 0
    %s42 = ssub.s32 %s38, %s41
    %p43 = scmp.eq.s32.totalorder %s42, 0
    %s45 = sadd.s32 %s44, 1
    %s46 = scalar_select %p43, %s44, %s45
    %p49 = pneg %p43
    %p50 = scmp.eq.s32.totalorder %s16, 1
    %p51 = por %p49, %p50
    %p52 = scmp.ne.s32.totalorder %s44, %s47
    %p53 = scmp.eq.s32.totalorder %s16, 0
    %p54 = por %p52, %p53
    %p55 = scmp.ne.s32.totalorder %s44, %s47
    %p56 = scmp.eq.s32.totalorder %s21, 1
    %p57 = por %p55, %p56
    %p58 = scmp.ne.s32.totalorder %s47, %s48
    %p59 = scmp.eq.s32.totalorder %s21, 0
    %p60 = por %p58, %p59
    %p61 = scmp.ne.s32.totalorder %s47, %s48
    %p62 = scmp.eq.s32.totalorder %s22, 1
    %p63 = por %p61, %p62
    %p65 = scmp.ne.s32.totalorder %s48, %s64
    %p66 = scmp.eq.s32.totalorder %s22, 0
    %p67 = por %p65, %p66
    %s68 = sadd.s32 %s23, %s24
    %p69 = scmp.lt.s32.totalorder %s68, 0
    %s70 = scalar_select %p69, %s68, 0
    %s71 = sadd.s32 %s35, %s31
    %p72 = scmp.lt.s32.totalorder %s71, 0
    %s73 = scalar_select %p72, %s71, 0
    %s74 = ssub.s32 %s70, %s73
    %p75 = scmp.eq.s32.totalorder %s74, 0
    %s77 = sadd.s32 %s76, 1
    %s78 = scalar_select %p75, %s76, %s77
    %p81 = pneg %p75
    %p82 = scmp.eq.s32.totalorder %s16, 1
    %p83 = por %p81, %p82
    %p84 = scmp.ne.s32.totalorder %s76, %s79
    %p85 = scmp.eq.s32.totalorder %s16, 0
    %p86 = por %p84, %p85
    %p87 = scmp.ne.s32.totalorder %s76, %s79
    %p88 = scmp.eq.s32.totalorder %s21, 1
    %p89 = por %p87, %p88
    %p90 = scmp.ne.s32.totalorder %s79, %s80
    %p91 = scmp.eq.s32.totalorder %s21, 0
    %p92 = por %p90, %p91
    %p93 = scmp.ne.s32.totalorder %s79, %s80
    %p94 = scmp.eq.s32.totalorder %s22, 1
    %p95 = por %p93, %p94
    %p97 = scmp.ne.s32.totalorder %s80, %s96
    %p98 = scmp.eq.s32.totalorder %s22, 0
    %p99 = por %p97, %p98
    %s100 = sadd.s32 %s23, %s24
    %p101 = scmp.lt.s32.totalorder %s100, 0
    %s102 = scalar_select %p101, %s100, 0
    %s103 = sadd.s32 %s35, %s31
    %p104 = scmp.lt.s32.totalorder %s103, 0
    %s105 = scalar_select %p104, %s103, 0
    %s106 = ssub.s32 %s102, %s105
    %p107 = scmp.eq.s32.totalorder %s106, 0
    %s109 = sadd.s32 %s108, 1
    %s110 = scalar_select %p107, %s108, %s109
    %p113 = pneg %p107
    %p114 = scmp.eq.s32.totalorder %s16, 1
    %p115 = por %p113, %p114
    %p116 = scmp.ne.s32.totalorder %s108, %s111
    %p117 = scmp.eq.s32.totalorder %s16, 0
    %p118 = por %p116, %p117
    %p119 = scmp.ne.s32.totalorder %s108, %s111
    %p120 = scmp.eq.s32.totalorder %s21, 1
    %p121 = por %p119, %p120
    %p122 = scmp.ne.s32.totalorder %s111, %s112
    %p123 = scmp.eq.s32.totalorder %s21, 0
    %p124 = por %p122, %p123
    %p125 = scmp.ne.s32.totalorder %s111, %s112
    %p126 = scmp.eq.s32.totalorder %s22, 1
    %p127 = por %p125, %p126
    %p129 = scmp.ne.s32.totalorder %s112, %s128
    %p130 = scmp.eq.s32.totalorder %s22, 0
    %p131 = por %p129, %p130
    %s132 = sadd.s32 %s23, %s24
    %p133 = scmp.lt.s32.totalorder %s132, 0
    %s134 = scalar_select %p133, %s132, 0
    %s135 = sadd.s32 %s35, %s31
    %p136 = scmp.lt.s32.totalorder %s135, 0
    %s137 = scalar_select %p136, %s135, 0
    %s138 = ssub.s32 %s134, %s137
    %p139 = scmp.eq.s32.totalorder %s138, 0
    %s141 = sadd.s32 %s140, 1
    %s142 = scalar_select %p139, %s140, %s141
    %p145 = pneg %p139
    %p146 = scmp.eq.s32.totalorder %s16, 1
    %p147 = por %p145, %p146
    %p148 = scmp.ne.s32.totalorder %s140, %s143
    %p149 = scmp.eq.s32.totalorder %s16, 0
    %p150 = por %p148, %p149
    %p151 = scmp.ne.s32.totalorder %s140, %s143
    %p152 = scmp.eq.s32.totalorder %s21, 1
    %p153 = por %p151, %p152
    %p154 = scmp.ne.s32.totalorder %s143, %s144
    %p155 = scmp.eq.s32.totalorder %s21, 0
    %p156 = por %p154, %p155
    %p157 = scmp.ne.s32.totalorder %s143, %s144
    %p158 = scmp.eq.s32.totalorder %s22, 1
    %p159 = por %p157, %p158
    %p161 = scmp.ne.s32.totalorder %s144, %s160
    %p162 = scmp.eq.s32.totalorder %s22, 0
    %p163 = por %p161, %p162
    %s164 = sadd.s32 %s23, %s24
    %p165 = scmp.lt.s32.totalorder %s164, 0
    %s166 = scalar_select %p165, %s164, 0
    %s167 = sadd.s32 %s35, %s31
    %p168 = scmp.lt.s32.totalorder %s167, 0
    %s169 = scalar_select %p168, %s167, 0
    %s170 = ssub.s32 %s166, %s169
    %p171 = scmp.eq.s32.totalorder %s170, 0
    %s173 = sadd.s32 %s172, 1
    %s174 = scalar_select %p171, %s172, %s173
    %p177 = pneg %p171
    %p178 = scmp.eq.s32.totalorder %s16, 1
    %p179 = por %p177, %p178
    %p180 = scmp.ne.s32.totalorder %s172, %s175
    %p181 = scmp.eq.s32.totalorder %s16, 0
    %p182 = por %p180, %p181
    %p183 = scmp.ne.s32.totalorder %s172, %s175
    %p184 = scmp.eq.s32.totalorder %s21, 1
    %p185 = por %p183, %p184
    %p186 = scmp.ne.s32.totalorder %s175, %s176
    %p187 = scmp.eq.s32.totalorder %s21, 0
    %p188 = por %p186, %p187
    %p189 = scmp.ne.s32.totalorder %s175, %s176
    %p190 = scmp.eq.s32.totalorder %s22, 1
    %p191 = por %p189, %p190
    %p193 = scmp.ne.s32.totalorder %s176, %s192
    %p194 = scmp.eq.s32.totalorder %s22, 0
    %p195 = por %p193, %p194
    %s196 = sadd.s32 %s23, %s24
    %p197 = scmp.lt.s32.totalorder %s196, 0
    %s198 = scalar_select %p197, %s196, 0
    %s199 = sadd.s32 %s35, %s31
    %p200 = scmp.lt.s32.totalorder %s199, 0
    %s201 = scalar_select %p200, %s199, 0
    %s202 = ssub.s32 %s198, %s201
    %p203 = scmp.eq.s32.totalorder %s202, 0
    %s205 = sadd.s32 %s204, 1
    %s206 = scalar_select %p203, %s204, %s205
    %p209 = pneg %p203
    %p210 = scmp.eq.s32.totalorder %s16, 1
    %p211 = por %p209, %p210
    %p212 = scmp.ne.s32.totalorder %s204, %s207
    %p213 = scmp.eq.s32.totalorder %s16, 0
    %p214 = por %p212, %p213
    %p215 = scmp.ne.s32.totalorder %s204, %s207
    %p216 = scmp.eq.s32.totalorder %s21, 1
    %p217 = por %p215, %p216
    %p218 = scmp.ne.s32.totalorder %s207, %s208
    %p219 = scmp.eq.s32.totalorder %s21, 0
    %p220 = por %p218, %p219
    %p221 = scmp.ne.s32.totalorder %s207, %s208
    %p222 = scmp.eq.s32.totalorder %s22, 1
    %p223 = por %p221, %p222
    %p225 = scmp.ne.s32.totalorder %s208, %s224
    %p226 = scmp.eq.s32.totalorder %s22, 0
    %p227 = por %p225, %p226
    %s228 = sadd.s32 %s23, %s24
    %p229 = scmp.lt.s32.totalorder %s228, 0
    %s230 = scalar_select %p229, %s228, 0
    %s231 = sadd.s32 %s35, %s31
    %p232 = scmp.lt.s32.totalorder %s231, 0
    %s233 = scalar_select %p232, %s231, 0
    %s234 = ssub.s32 %s230, %s233
    %p235 = scmp.eq.s32.totalorder %s234, 0
    %s237 = sadd.s32 %s236, 1
    %s238 = scalar_select %p235, %s236, %s237
    %p241 = pneg %p235
    %p242 = scmp.eq.s32.totalorder %s16, 1
    %p243 = por %p241, %p242
    %p244 = scmp.ne.s32.totalorder %s236, %s239
    %p245 = scmp.eq.s32.totalorder %s16, 0
    %p246 = por %p244, %p245
    %p247 = scmp.ne.s32.totalorder %s236, %s239
    %p248 = scmp.eq.s32.totalorder %s21, 1
    %p249 = por %p247, %p248
    %p250 = scmp.ne.s32.totalorder %s239, %s240
    %p251 = scmp.eq.s32.totalorder %s21, 0
    %p252 = por %p250, %p251
    %p253 = scmp.ne.s32.totalorder %s239, %s240
    %p254 = scmp.eq.s32.totalorder %s22, 1
    %p255 = por %p253, %p254
    %p257 = scmp.ne.s32.totalorder %s240, %s256
    %p258 = scmp.eq.s32.totalorder %s22, 0
    %p259 = por %p257, %p258
    %s260 = ssub.s32 %s23, %s35
    %p261 = scmp.eq.s32.totalorder %s260, 0
    %s263 = sadd.s32 %s262, 1
    %s264 = scalar_select %p261, %s262, %s263
    %p267 = pneg %p261
    %p268 = scmp.eq.s32.totalorder %s16, 1
    %p269 = por %p267, %p268
    %p270 = scmp.ne.s32.totalorder %s262, %s265
    %p271 = scmp.eq.s32.totalorder %s16, 0
    %p272 = por %p270, %p271
    %p273 = scmp.ne.s32.totalorder %s262, %s265
    %p274 = scmp.eq.s32.totalorder %s21, 1
    %p275 = por %p273, %p274
    %p276 = scmp.ne.s32.totalorder %s265, %s266
    %p277 = scmp.eq.s32.totalorder %s21, 0
    %p278 = por %p276, %p277
    %p279 = scmp.ne.s32.totalorder %s265, %s266
    %p280 = scmp.eq.s32.totalorder %s22, 1
    %p281 = por %p279, %p280
    %p283 = scmp.ne.s32.totalorder %s266, %s282
    %p284 = scmp.eq.s32.totalorder %s22, 0
    %p285 = por %p283, %p284
    %s286 = ssub.s32 %s23, %s35
    %p287 = scmp.eq.s32.totalorder %s286, 0
    %s289 = sadd.s32 %s288, 1
    %s290 = scalar_select %p287, %s288, %s289
    %p293 = pneg %p287
    %p294 = scmp.eq.s32.totalorder %s16, 1
    %p295 = por %p293, %p294
    %p296 = scmp.ne.s32.totalorder %s288, %s291
    %p297 = scmp.eq.s32.totalorder %s16, 0
    %p298 = por %p296, %p297
    %p299 = scmp.ne.s32.totalorder %s288, %s291
    %p300 = scmp.eq.s32.totalorder %s21, 1
    %p301 = por %p299, %p300
    %p302 = scmp.ne.s32.totalorder %s291, %s292
    %p303 = scmp.eq.s32.totalorder %s21, 0
    %p304 = por %p302, %p303
    %p305 = scmp.ne.s32.totalorder %s291, %s292
    %p306 = scmp.eq.s32.totalorder %s22, 1
    %p307 = por %p305, %p306
    %p309 = scmp.ne.s32.totalorder %s292, %s308
    %p310 = scmp.eq.s32.totalorder %s22, 0
    %p311 = por %p309, %p310
    %s312 = ssub.s32 %s23, %s35
    %p313 = scmp.eq.s32.totalorder %s312, 0
    %s315 = sadd.s32 %s314, 1
    %s316 = scalar_select %p313, %s314, %s315
    %p319 = pneg %p313
    %p320 = scmp.eq.s32.totalorder %s16, 1
    %p321 = por %p319, %p320
    %p322 = scmp.ne.s32.totalorder %s314, %s317
    %p323 = scmp.eq.s32.totalorder %s16, 0
    %p324 = por %p322, %p323
    %p325 = scmp.ne.s32.totalorder %s314, %s317
    %p326 = scmp.eq.s32.totalorder %s21, 1
    %p327 = por %p325, %p326
    %p328 = scmp.ne.s32.totalorder %s317, %s318
    %p329 = scmp.eq.s32.totalorder %s21, 0
    %p330 = por %p328, %p329
    %p331 = scmp.ne.s32.totalorder %s317, %s318
    %p332 = scmp.eq.s32.totalorder %s22, 1
    %p333 = por %p331, %p332
    %p335 = scmp.ne.s32.totalorder %s318, %s334
    %p336 = scmp.eq.s32.totalorder %s22, 0
    %p337 = por %p335, %p336
    %p338 = scmp.le.s32.totalorder 1, %s16
    %p339 = scmp.lt.s32.totalorder %s16, 3
    %p340 = pnand %p338, %p339
    %p341 = pneg %p340
    // Predicated region
    $region9: #{balanced_bce_loss_ds.1} parent=5 // pred_check
      _
    $region10: #{balanced_bce_loss_ds.1} parent=5 // pred_check_branch
      %343 = sbr.rel (%p340) target = $region12
    $region11: #{balanced_bce_loss_ds.1} parent=5 // pred_region
      %s344 = ssub.s32 %s16, 1
    $region12: #{balanced_bce_loss_ds.1} parent=5 // pred_fallthru
      _
    %p345 = scmp.lt.s32.totalorder %s16, 2
    // Predicated region
    $region13: #{balanced_bce_loss_ds.1} parent=5 // pred_check
      %p346 = pneg %p345
    $region14: #{balanced_bce_loss_ds.1} parent=5 // pred_check_branch
      %348 = sbr.rel (%p346) target = $region16
    $region15: #{balanced_bce_loss_ds.1} parent=5 // pred_region
      // Predicated region
      $region17: #{balanced_bce_loss_ds.1} parent=15 // pred_check
        %p349 = pneg %p54
      $region18: #{balanced_bce_loss_ds.1} parent=15 // pred_check_branch
        %351 = sbr.rel (%p349) target = $region20
      $region19: #{balanced_bce_loss_ds.1} parent=15 // pred_region
        %s352 = sadd.s32 %s23, %s24
        %p353 = scmp.lt.s32.totalorder %s352, 0
        %s354 = scalar_select %p353, %s352, 0
        %s355 = smul.u32 2, %s354
        %p356 = scmp.lt.s32.totalorder %s355, 1
        %s357 = scalar_select %p356, %s355, 1
        %s358 = smul.addr %s357, 8
        %s359 = scalar_lea.vmem %s0, %s358
        %s360 = sadd.s32 %s23, %s24
        %p361 = scmp.lt.s32.totalorder %s360, 0
        %s362 = scalar_select %p361, %s360, 0
        %s363 = smul.u32 2, %s362
      $region20: #{balanced_bce_loss_ds.1} parent=15 // pred_fallthru
        _
      // Predicated region
      $region21: #{balanced_bce_loss_ds.1} parent=15 // pred_check
        %p364 = pneg %p86
      $region22: #{balanced_bce_loss_ds.1} parent=15 // pred_check_branch
        %366 = sbr.rel (%p364) target = $region24
      $region23: #{balanced_bce_loss_ds.1} parent=15 // pred_region
        %s367 = sadd.s32 %s23, %s24
        %p368 = scmp.lt.s32.totalorder %s367, 0
        %s369 = scalar_select %p368, %s367, 0
        %s370 = smul.u32 2, %s369
        %p371 = scmp.lt.s32.totalorder %s370, 1
        %s372 = scalar_select %p371, %s370, 1
        %s373 = smul.addr %s372, 8
        %s374 = scalar_lea.vmem %s1, %s373
        %s375 = sadd.s32 %s23, %s24
        %p376 = scmp.lt.s32.totalorder %s375, 0
        %s377 = scalar_select %p376, %s375, 0
        %s378 = smul.u32 2, %s377
      $region24: #{balanced_bce_loss_ds.1} parent=15 // pred_fallthru
        _
      // Predicated region
      $region25: #{balanced_bce_loss_ds.1} parent=15 // pred_check
        %p379 = pneg %p118
      $region26: #{balanced_bce_loss_ds.1} parent=15 // pred_check_branch
        %381 = sbr.rel (%p379) target = $region28
      $region27: #{balanced_bce_loss_ds.1} parent=15 // pred_region
        %s382 = sadd.s32 %s23, %s24
        %p383 = scmp.lt.s32.totalorder %s382, 0
        %s384 = scalar_select %p383, %s382, 0
        %s385 = smul.u32 2, %s384
        %p386 = scmp.lt.s32.totalorder %s385, 1
        %s387 = scalar_select %p386, %s385, 1
        %s388 = smul.addr %s387, 8
        %s389 = scalar_lea.vmem %s2, %s388
        %s390 = sadd.s32 %s23, %s24
        %p391 = scmp.lt.s32.totalorder %s390, 0
        %s392 = scalar_select %p391, %s390, 0
        %s393 = smul.u32 2, %s392
      $region28: #{balanced_bce_loss_ds.1} parent=15 // pred_fallthru
        _
      // Predicated region
      $region29: #{balanced_bce_loss_ds.1} parent=15 // pred_check
        %p394 = pneg %p150
      $region30: #{balanced_bce_loss_ds.1} parent=15 // pred_check_branch
        %396 = sbr.rel (%p394) target = $region32
      $region31: #{balanced_bce_loss_ds.1} parent=15 // pred_region
        %s397 = sadd.s32 %s23, %s24
        %p398 = scmp.lt.s32.totalorder %s397, 0
        %s399 = scalar_select %p398, %s397, 0
        %s400 = smul.u32 2, %s399
        %p401 = scmp.lt.s32.totalorder %s400, 1
        %s402 = scalar_select %p401, %s400, 1
        %s403 = smul.addr %s402, 8
        %s404 = scalar_lea.vmem %s3, %s403
        %s405 = sadd.s32 %s23, %s24
        %p406 = scmp.lt.s32.totalorder %s405, 0
        %s407 = scalar_select %p406, %s405, 0
        %s408 = smul.u32 2, %s407
      $region32: #{balanced_bce_loss_ds.1} parent=15 // pred_fallthru
        _
      // Predicated region
      $region33: #{balanced_bce_loss_ds.1} parent=15 // pred_check
        %p409 = pneg %p182
      $region34: #{balanced_bce_loss_ds.1} parent=15 // pred_check_branch
        %411 = sbr.rel (%p409) target = $region36
      $region35: #{balanced_bce_loss_ds.1} parent=15 // pred_region
        %s412 = sadd.s32 %s23, %s24
        %p413 = scmp.lt.s32.totalorder %s412, 0
        %s414 = scalar_select %p413, %s412, 0
        %s415 = smul.u32 2, %s414
        %p416 = scmp.lt.s32.totalorder %s415, 1
        %s417 = scalar_select %p416, %s415, 1
        %s418 = smul.addr %s417, 8
        %s419 = scalar_lea.vmem %s4, %s418
        %s420 = sadd.s32 %s23, %s24
        %p421 = scmp.lt.s32.totalorder %s420, 0
        %s422 = scalar_select %p421, %s420, 0
        %s423 = smul.u32 2, %s422
      $region36: #{balanced_bce_loss_ds.1} parent=15 // pred_fallthru
        _
      // Predicated region
      $region37: #{balanced_bce_loss_ds.1} parent=15 // pred_check
        %p424 = pneg %p214
      $region38: #{balanced_bce_loss_ds.1} parent=15 // pred_check_branch
        %426 = sbr.rel (%p424) target = $region40
      $region39: #{balanced_bce_loss_ds.1} parent=15 // pred_region
        %s427 = sadd.s32 %s23, %s24
        %p428 = scmp.lt.s32.totalorder %s427, 0
        %s429 = scalar_select %p428, %s427, 0
        %s430 = smul.u32 2, %s429
        %p431 = scmp.lt.s32.totalorder %s430, 1
        %s432 = scalar_select %p431, %s430, 1
        %s433 = smul.addr %s432, 8
        %s434 = scalar_lea.vmem %s5, %s433
        %s435 = sadd.s32 %s23, %s24
        %p436 = scmp.lt.s32.totalorder %s435, 0
        %s437 = scalar_select %p436, %s435, 0
        %s438 = smul.u32 2, %s437
      $region40: #{balanced_bce_loss_ds.1} parent=15 // pred_fallthru
        _
      // Predicated region
      $region41: #{balanced_bce_loss_ds.1} parent=15 // pred_check
        %p439 = pneg %p246
      $region42: #{balanced_bce_loss_ds.1} parent=15 // pred_check_branch
        %441 = sbr.rel (%p439) target = $region44
      $region43: #{balanced_bce_loss_ds.1} parent=15 // pred_region
        %s442 = sadd.s32 %s23, %s24
        %p443 = scmp.lt.s32.totalorder %s442, 0
        %s444 = scalar_select %p443, %s442, 0
        %s445 = smul.u32 2, %s444
        %p446 = scmp.lt.s32.totalorder %s445, 1
        %s447 = scalar_select %p446, %s445, 1
        %s448 = smul.addr %s447, 8
        %s449 = scalar_lea.vmem %s6, %s448
        %s450 = sadd.s32 %s23, %s24
        %p451 = scmp.lt.s32.totalorder %s450, 0
        %s452 = scalar_select %p451, %s450, 0
        %s453 = smul.u32 2, %s452
      $region44: #{balanced_bce_loss_ds.1} parent=15 // pred_fallthru
        _
    $region16: #{balanced_bce_loss_ds.1} parent=5 // pred_fallthru
      _
    %p454 = scmp.le.s32.totalorder 1, %s16
    %p455 = scmp.lt.s32.totalorder %s16, 3
    %p456 = pnand %p454, %p455
    %p457 = pneg %p456
    // Predicated region
    $region45: #{balanced_bce_loss_ds.1} parent=5 // pred_check
      _
    $region46: #{balanced_bce_loss_ds.1} parent=5 // pred_check_branch
      %459 = sbr.rel (%p456) target = $region48
    $region47: #{balanced_bce_loss_ds.1} parent=5 // pred_region
      %s460 = ssub.s32 %s16, 1
      %s461 = sadd.s32 %s25, %s26
      %p462 = scmp.lt.s32.totalorder %s461, 0
      %s463 = scalar_select %p462, %s461, 0
      %s464 = smul.u32 2, %s463
      %p465 = scmp.lt.s32.totalorder %s464, 1
      %s466 = scalar_select %p465, %s464, 1
      %s467 = smul.addr %s466, 8
      %s468 = scalar_lea.vmem %s0, %s467
      %p469 = pneg %p60
      %p470 = pneg %p57
      %s471 = sadd.s32 %s25, %s26
      %p472 = scmp.lt.s32.totalorder %s471, 0
      %s473 = scalar_select %p472, %s471, 0
      %s474 = smul.u32 2, %s473
      %p475 = scmp.lt.s32.totalorder %s474, 1
      %s476 = scalar_select %p475, %s474, 1
      %s477 = smul.addr %s476, 8
      %s478 = scalar_lea.vmem %s1, %s477
      %p479 = pneg %p92
      %p480 = pneg %p89
      %s481 = sadd.s32 %s25, %s26
      %p482 = scmp.lt.s32.totalorder %s481, 0
      %s483 = scalar_select %p482, %s481, 0
      %s484 = smul.u32 2, %s483
      %p485 = scmp.lt.s32.totalorder %s484, 1
      %s486 = scalar_select %p485, %s484, 1
      %s487 = smul.addr %s486, 8
      %s488 = scalar_lea.vmem %s2, %s487
      %p489 = pneg %p124
      %p490 = pneg %p121
      %s491 = sadd.s32 %s25, %s26
      %p492 = scmp.lt.s32.totalorder %s491, 0
      %s493 = scalar_select %p492, %s491, 0
      %s494 = smul.u32 2, %s493
      %p495 = scmp.lt.s32.totalorder %s494, 1
      %s496 = scalar_select %p495, %s494, 1
      %s497 = smul.addr %s496, 8
      %s498 = scalar_lea.vmem %s3, %s497
      %p499 = pneg %p156
      %p500 = pneg %p153
      %s501 = sadd.s32 %s25, %s26
      %p502 = scmp.lt.s32.totalorder %s501, 0
      %s503 = scalar_select %p502, %s501, 0
      %s504 = smul.u32 2, %s503
      %p505 = scmp.lt.s32.totalorder %s504, 1
      %s506 = scalar_select %p505, %s504, 1
      %s507 = smul.addr %s506, 8
      %s508 = scalar_lea.vmem %s4, %s507
      %p509 = pneg %p188
      %p510 = pneg %p185
      %s511 = sadd.s32 %s25, %s26
      %p512 = scmp.lt.s32.totalorder %s511, 0
      %s513 = scalar_select %p512, %s511, 0
      %s514 = smul.u32 2, %s513
      %p515 = scmp.lt.s32.totalorder %s514, 1
      %s516 = scalar_select %p515, %s514, 1
      %s517 = smul.addr %s516, 8
      %s518 = scalar_lea.vmem %s5, %s517
      %p519 = pneg %p220
      %p520 = pneg %p217
      %s521 = sadd.s32 %s25, %s26
      %p522 = scmp.lt.s32.totalorder %s521, 0
      %s523 = scalar_select %p522, %s521, 0
      %s524 = smul.u32 2, %s523
      %p525 = scmp.lt.s32.totalorder %s524, 1
      %s526 = scalar_select %p525, %s524, 1
      %s527 = smul.addr %s526, 8
      %s528 = scalar_lea.vmem %s6, %s527
      %p529 = pneg %p252
      %p530 = pneg %p249
      %p531 = pneg %p278
      %p532 = pneg %p275
      %p533 = scmp.lt.s32.totalorder %s25, 1
      %s534 = scalar_select %p533, %s25, 1
      %s535 = smul.addr %s534, 8
      %s536 = scalar_lea.vmem %s7, %s535
      %p537 = pneg %p304
      %p538 = pneg %p301
      %p539 = scmp.lt.s32.totalorder %s25, 1
      %s540 = scalar_select %p539, %s25, 1
      %s541 = smul.addr %s540, 8
      %s542 = scalar_lea.vmem %s8, %s541
      %p543 = pneg %p330
      %p544 = pneg %p327
      %p545 = scmp.lt.s32.totalorder %s25, 1
      %s546 = scalar_select %p545, %s25, 1
      %s547 = smul.addr %s546, 8
      %s548 = scalar_lea.vmem %s9, %s547
      %s549 = sadd.s32 %s25, %s26
      %p550 = scmp.lt.s32.totalorder %s549, 0
      %s551 = scalar_select %p550, %s549, 0
      %s552 = smul.u32 2, %s551
      %p553 = scmp.lt.s32.totalorder %s552, 1
      %s554 = scalar_select %p553, %s552, 1
      %s555 = smul.addr %s554, 8
      %s556 = scalar_lea.vmem %s0, %s555
      %s557 = sadd.s32 %s25, %s26
      %p558 = scmp.lt.s32.totalorder %s557, 0
      %s559 = scalar_select %p558, %s557, 0
      %s560 = smul.u32 2, %s559
      %s561 = sadd.s32 %s25, %s26
      %p562 = scmp.lt.s32.totalorder %s561, 0
      %s563 = scalar_select %p562, %s561, 0
      %s564 = smul.u32 2, %s563
      %p565 = scmp.lt.s32.totalorder %s564, 1
      %s566 = scalar_select %p565, %s564, 1
      %s567 = smul.addr %s566, 8
      %s568 = scalar_lea.vmem %s1, %s567
      %s569 = sadd.s32 %s25, %s26
      %p570 = scmp.lt.s32.totalorder %s569, 0
      %s571 = scalar_select %p570, %s569, 0
      %s572 = smul.u32 2, %s571
      %s573 = sadd.s32 %s25, %s26
      %p574 = scmp.lt.s32.totalorder %s573, 0
      %s575 = scalar_select %p574, %s573, 0
      %s576 = smul.u32 2, %s575
      %p577 = scmp.lt.s32.totalorder %s576, 1
      %s578 = scalar_select %p577, %s576, 1
      %s579 = smul.addr %s578, 8
      %s580 = scalar_lea.vmem %s2, %s579
      %s581 = sadd.s32 %s25, %s26
      %p582 = scmp.lt.s32.totalorder %s581, 0
      %s583 = scalar_select %p582, %s581, 0
      %s584 = smul.u32 2, %s583
      %s585 = sadd.s32 %s25, %s26
      %p586 = scmp.lt.s32.totalorder %s585, 0
      %s587 = scalar_select %p586, %s585, 0
      %s588 = smul.u32 2, %s587
      %p589 = scmp.lt.s32.totalorder %s588, 1
      %s590 = scalar_select %p589, %s588, 1
      %s591 = smul.addr %s590, 8
      %s592 = scalar_lea.vmem %s3, %s591
      %s593 = sadd.s32 %s25, %s26
      %p594 = scmp.lt.s32.totalorder %s593, 0
      %s595 = scalar_select %p594, %s593, 0
      %s596 = smul.u32 2, %s595
      %s597 = sadd.s32 %s25, %s26
      %p598 = scmp.lt.s32.totalorder %s597, 0
      %s599 = scalar_select %p598, %s597, 0
      %s600 = smul.u32 2, %s599
      %p601 = scmp.lt.s32.totalorder %s600, 1
      %s602 = scalar_select %p601, %s600, 1
      %s603 = smul.addr %s602, 8
      %s604 = scalar_lea.vmem %s4, %s603
      %s605 = sadd.s32 %s25, %s26
      %p606 = scmp.lt.s32.totalorder %s605, 0
      %s607 = scalar_select %p606, %s605, 0
      %s608 = smul.u32 2, %s607
      %s609 = sadd.s32 %s25, %s26
      %p610 = scmp.lt.s32.totalorder %s609, 0
      %s611 = scalar_select %p610, %s609, 0
      %s612 = smul.u32 2, %s611
      %p613 = scmp.lt.s32.totalorder %s612, 1
      %s614 = scalar_select %p613, %s612, 1
      %s615 = smul.addr %s614, 8
      %s616 = scalar_lea.vmem %s5, %s615
      %s617 = sadd.s32 %s25, %s26
      %p618 = scmp.lt.s32.totalorder %s617, 0
      %s619 = scalar_select %p618, %s617, 0
      %s620 = smul.u32 2, %s619
      %s621 = sadd.s32 %s25, %s26
      %p622 = scmp.lt.s32.totalorder %s621, 0
      %s623 = scalar_select %p622, %s621, 0
      %s624 = smul.u32 2, %s623
      %p625 = scmp.lt.s32.totalorder %s624, 1
      %s626 = scalar_select %p625, %s624, 1
      %s627 = smul.addr %s626, 8
      %s628 = scalar_lea.vmem %s6, %s627
      %s629 = sadd.s32 %s25, %s26
      %p630 = scmp.lt.s32.totalorder %s629, 0
      %s631 = scalar_select %p630, %s629, 0
      %s632 = smul.u32 2, %s631
      %p633 = scmp.lt.s32.totalorder %s25, 1
      %s634 = scalar_select %p633, %s25, 1
      %s635 = smul.addr %s634, 8
      %s636 = scalar_lea.vmem %s7, %s635
      %p637 = scmp.lt.s32.totalorder %s25, 1
      %s638 = scalar_select %p637, %s25, 1
      %s639 = smul.addr %s638, 8
      %s640 = scalar_lea.vmem %s8, %s639
      %p641 = scmp.lt.s32.totalorder %s25, 1
      %s642 = scalar_select %p641, %s25, 1
      %s643 = smul.addr %s642, 8
      %s644 = scalar_lea.vmem %s9, %s643
      %p645 = scmp.eq.s32.totalorder %s26, 0
      // Predicated region
      $region49: #{balanced_bce_loss_ds.1} parent=47 // pred_check
        %p646 = pneg %p645
      $region50: #{balanced_bce_loss_ds.1} parent=47 // pred_check_branch
        %648 = sbr.rel (%p646) target = $region52
      $region51: #{balanced_bce_loss_ds.1} parent=47 // pred_region
        %649 = vst [vmem:[%s636] sm:$0xff] 0.0
        %650 = vst [vmem:[%s640] sm:$0xff] 0.0
        %651 = vst [vmem:[%s644] sm:$0xff] 0.0
      $region52: #{balanced_bce_loss_ds.1} parent=47 // pred_fallthru
        _
      %v652 = vld [vmem:[%s628] sm:$0xff]
      %v653 = vld [vmem:[%s628 + $0x8] sm:$0xff]
      %v654 = vsub.f32 1.0, %v652
      %v655 = vsub.f32 1.0, %v653
      %v656 = vld [vmem:[%s556] sm:$0xff]
      %v657 = vld [vmem:[%s556 + $0x8] sm:$0xff]
      %v658 = vlog2.pop %v656
      %v659 = vmul.f32 %v658, 0.6931472
      %v660 = vlog2.pop %v657
      %v661 = vmul.f32 %v660, 0.6931472
      %v662 = vmax.f32 %v659, -100.0
      %v663 = vmax.f32 %v661, -100.0
      %v664 = vsub.f32 1.0, %v656
      %v665 = vsub.f32 1.0, %v657
      %v666 = vlog2.pop %v664
      %v667 = vmul.f32 %v666, 0.6931472
      %v668 = vlog2.pop %v665
      %v669 = vmul.f32 %v668, 0.6931472
      %v670 = vmax.f32 %v667, -100.0
      %v671 = vmax.f32 %v669, -100.0
      %v672 = vmul.f32 %v652, %v662
      %v673 = vmul.f32 %v653, %v663
      %v674 = vmul.f32 %v654, %v670
      %v675 = vmul.f32 %v655, %v671
      %v676 = vadd.f32 %v672, %v674
      %v677 = vadd.f32 %v673, %v675
      %v678 = vadd.f32 %v676, 0.0
      %v679 = vadd.f32 %v677, 0.0
      %v680 = vld [vmem:[%s568] sm:$0xff]
      %v681 = vld [vmem:[%s568 + $0x8] sm:$0xff]
      %v682 = vlog2.pop %v680
      %v683 = vmul.f32 %v682, 0.6931472
      %v684 = vlog2.pop %v681
      %v685 = vmul.f32 %v684, 0.6931472
      %v686 = vmax.f32 %v683, -100.0
      %v687 = vmax.f32 %v685, -100.0
      %v688 = vsub.f32 1.0, %v680
      %v689 = vsub.f32 1.0, %v681
      %v690 = vlog2.pop %v688
      %v691 = vmul.f32 %v690, 0.6931472
      %v692 = vlog2.pop %v689
      %v693 = vmul.f32 %v692, 0.6931472
      %v694 = vmax.f32 %v691, -100.0
      %v695 = vmax.f32 %v693, -100.0
      %v696 = vmul.f32 %v652, %v686
      %v697 = vmul.f32 %v653, %v687
      %v698 = vmul.f32 %v654, %v694
      %v699 = vmul.f32 %v655, %v695
      %v700 = vadd.f32 %v696, %v698
      %v701 = vadd.f32 %v697, %v699
      %v702 = vadd.f32 %v678, %v700
      %v703 = vadd.f32 %v679, %v701
      %v704 = vld [vmem:[%s580] sm:$0xff]
      %v705 = vld [vmem:[%s580 + $0x8] sm:$0xff]
      %v706 = vlog2.pop %v704
      %v707 = vmul.f32 %v706, 0.6931472
      %v708 = vlog2.pop %v705
      %v709 = vmul.f32 %v708, 0.6931472
      %v710 = vmax.f32 %v707, -100.0
      %v711 = vmax.f32 %v709, -100.0
      %v712 = vsub.f32 1.0, %v704
      %v713 = vsub.f32 1.0, %v705
      %v714 = vlog2.pop %v712
      %v715 = vmul.f32 %v714, 0.6931472
      %v716 = vlog2.pop %v713
      %v717 = vmul.f32 %v716, 0.6931472
      %v718 = vmax.f32 %v715, -100.0
      %v719 = vmax.f32 %v717, -100.0
      %v720 = vmul.f32 %v652, %v710
      %v721 = vmul.f32 %v653, %v711
      %v722 = vmul.f32 %v654, %v718
      %v723 = vmul.f32 %v655, %v719
      %v724 = vadd.f32 %v720, %v722
      %v725 = vadd.f32 %v721, %v723
      %v726 = vadd.f32 %v702, %v724
      %v727 = vadd.f32 %v703, %v725
      %v728 = vld [vmem:[%s592] sm:$0xff]
      %v729 = vld [vmem:[%s592 + $0x8] sm:$0xff]
      %v730 = vlog2.pop %v728
      %v731 = vmul.f32 %v730, 0.6931472
      %v732 = vlog2.pop %v729
      %v733 = vmul.f32 %v732, 0.6931472
      %v734 = vmax.f32 %v731, -100.0
      %v735 = vmax.f32 %v733, -100.0
      %v736 = vsub.f32 1.0, %v728
      %v737 = vsub.f32 1.0, %v729
      %v738 = vlog2.pop %v736
      %v739 = vmul.f32 %v738, 0.6931472
      %v740 = vlog2.pop %v737
      %v741 = vmul.f32 %v740, 0.6931472
      %v742 = vmax.f32 %v739, -100.0
      %v743 = vmax.f32 %v741, -100.0
      %v744 = vmul.f32 %v652, %v734
      %v745 = vmul.f32 %v653, %v735
      %v746 = vmul.f32 %v654, %v742
      %v747 = vmul.f32 %v655, %v743
      %v748 = vadd.f32 %v744, %v746
      %v749 = vadd.f32 %v745, %v747
      %v750 = vadd.f32 %v726, %v748
      %v751 = vadd.f32 %v727, %v749
      %v752 = vld [vmem:[%s604] sm:$0xff]
      %v753 = vld [vmem:[%s604 + $0x8] sm:$0xff]
      %v754 = vlog2.pop %v752
      %v755 = vmul.f32 %v754, 0.6931472
      %v756 = vlog2.pop %v753
      %v757 = vmul.f32 %v756, 0.6931472
      %v758 = vmax.f32 %v755, -100.0
      %v759 = vmax.f32 %v757, -100.0
      %v760 = vsub.f32 1.0, %v752
      %v761 = vsub.f32 1.0, %v753
      %v762 = vlog2.pop %v760
      %v763 = vmul.f32 %v762, 0.6931472
      %v764 = vlog2.pop %v761
      %v765 = vmul.f32 %v764, 0.6931472
      %v766 = vmax.f32 %v763, -100.0
      %v767 = vmax.f32 %v765, -100.0
      %v768 = vmul.f32 %v652, %v758
      %v769 = vmul.f32 %v653, %v759
      %v770 = vmul.f32 %v654, %v766
      %v771 = vmul.f32 %v655, %v767
      %v772 = vadd.f32 %v768, %v770
      %v773 = vadd.f32 %v769, %v771
      %v774 = vadd.f32 %v750, %v772
      %v775 = vadd.f32 %v751, %v773
      %v776 = vld [vmem:[%s616] sm:$0xff]
      %v777 = vld [vmem:[%s616 + $0x8] sm:$0xff]
      %v778 = vlog2.pop %v776
      %v779 = vmul.f32 %v778, 0.6931472
      %v780 = vlog2.pop %v777
      %v781 = vmul.f32 %v780, 0.6931472
      %v782 = vmax.f32 %v779, -100.0
      %v783 = vmax.f32 %v781, -100.0
      %v784 = vsub.f32 1.0, %v776
      %v785 = vsub.f32 1.0, %v777
      %v786 = vlog2.pop %v784
      %v787 = vmul.f32 %v786, 0.6931472
      %v788 = vlog2.pop %v785
      %v789 = vmul.f32 %v788, 0.6931472
      %v790 = vmax.f32 %v787, -100.0
      %v791 = vmax.f32 %v789, -100.0
      %v792 = vmul.f32 %v652, %v782
      %v793 = vmul.f32 %v653, %v783
      %v794 = vmul.f32 %v654, %v790
      %v795 = vmul.f32 %v655, %v791
      %v796 = vadd.f32 %v792, %v794
      %v797 = vadd.f32 %v793, %v795
      %v798 = vadd.f32 %v774, %v796
      %v799 = vadd.f32 %v775, %v797
      %v800 = vmul.f32 %v652, %v798
      %v801 = vmul.f32 %v653, %v799
      %v802 = vmul.f32 %v654, %v798
      %v803 = vmul.f32 %v655, %v799
      %s804 = sadd.s32 %s25, %s26
      %s805 = smul.u32 %s804, 16
      %v806 = vlaneseq
      %v807 = vshrl.u32 %v806, 7
      %v808 = vadd.s32 %v807, 8
      %v809 = vstv %s805
      %v810 = vadd.s32 %v807, %v809
      %v811 = vadd.s32 %v808, %v809
      %vm812 = vcmp.lt.s32.totalorder %v810, 16
      %vm813 = vcmp.lt.s32.totalorder %v811, 16
      %v814 = vsel %vm812, %v800, 0.0
      %v815 = vsel %vm813, %v801, 0.0
      %v816 = vsel %vm812, %v802, 0.0
      %v817 = vsel %vm813, %v803, 0.0
      %v818 = vsel %vm812, %v652, 0.0
      %v819 = vsel %vm813, %v653, 0.0
      %v820 = vld [vmem:[%s636] sm:$0xff]
      %v821 = vadd.f32 %v814, %v815
      %v822 = vadd.f32 %v820, %v821
      %823 = vst [vmem:[%s636] sm:$0xff] %v822
      %v824 = vld [vmem:[%s640] sm:$0xff]
      %v825 = vadd.f32 %v816, %v817
      %v826 = vadd.f32 %v824, %v825
      %827 = vst [vmem:[%s640] sm:$0xff] %v826
      %v828 = vld [vmem:[%s644] sm:$0xff]
      %v829 = vadd.f32 %v818, %v819
      %v830 = vadd.f32 %v828, %v829
      %831 = vst [vmem:[%s644] sm:$0xff] %v830
      %p832 = scmp.lt.s32.totalorder %s25, 1
      %s833 = scalar_select %p832, %s25, 1
      %s834 = smul.addr %s833, 8
      %s835 = scalar_lea.vmem %s7, %s834
      %p836 = scmp.lt.s32.totalorder %s25, 1
      %s837 = scalar_select %p836, %s25, 1
      %s838 = smul.addr %s837, 8
      %s839 = scalar_lea.vmem %s8, %s838
      %p840 = scmp.lt.s32.totalorder %s25, 1
      %s841 = scalar_select %p840, %s25, 1
      %s842 = smul.addr %s841, 8
      %s843 = scalar_lea.vmem %s9, %s842
      // Predicated region
      $region53: #{balanced_bce_loss_ds.1} parent=47 // pred_check
        %p844 = pneg %p275
      $region54: #{balanced_bce_loss_ds.1} parent=47 // pred_check_branch
        %846 = sbr.rel (%p844) target = $region56
      $region55: #{balanced_bce_loss_ds.1} parent=47 // pred_region
        _
      $region56: #{balanced_bce_loss_ds.1} parent=47 // pred_fallthru
        _
      // Predicated region
      $region57: #{balanced_bce_loss_ds.1} parent=47 // pred_check
        %p847 = pneg %p301
      $region58: #{balanced_bce_loss_ds.1} parent=47 // pred_check_branch
        %849 = sbr.rel (%p847) target = $region60
      $region59: #{balanced_bce_loss_ds.1} parent=47 // pred_region
        _
      $region60: #{balanced_bce_loss_ds.1} parent=47 // pred_fallthru
        _
      // Predicated region
      $region61: #{balanced_bce_loss_ds.1} parent=47 // pred_check
        %p850 = pneg %p327
      $region62: #{balanced_bce_loss_ds.1} parent=47 // pred_check_branch
        %852 = sbr.rel (%p850) target = $region64
      $region63: #{balanced_bce_loss_ds.1} parent=47 // pred_region
        _
      $region64: #{balanced_bce_loss_ds.1} parent=47 // pred_fallthru
        _
    $region48: #{balanced_bce_loss_ds.1} parent=5 // pred_fallthru
      _
    %p853 = scmp.le.s32.totalorder 2, %s16
    // Predicated region
    $region65: #{balanced_bce_loss_ds.1} parent=5 // pred_check
      %p854 = pneg %p853
    $region66: #{balanced_bce_loss_ds.1} parent=5 // pred_check_branch
      %856 = sbr.rel (%p854) target = $region68
    $region67: #{balanced_bce_loss_ds.1} parent=5 // pred_region
      %s857 = ssub.s32 %s16, 2
      // Predicated region
      $region69: #{balanced_bce_loss_ds.1} parent=67 // pred_check
        %p858 = pneg %p281
      $region70: #{balanced_bce_loss_ds.1} parent=67 // pred_check_branch
        %860 = sbr.rel (%p858) target = $region72
      $region71: #{balanced_bce_loss_ds.1} parent=67 // pred_region
        %p861 = scmp.lt.s32.totalorder %s27, 1
        %s862 = scalar_select %p861, %s27, 1
        %s863 = smul.addr %s862, 8
        %s864 = scalar_lea.vmem %s7, %s863
      $region72: #{balanced_bce_loss_ds.1} parent=67 // pred_fallthru
        _
      // Predicated region
      $region73: #{balanced_bce_loss_ds.1} parent=67 // pred_check
        %p865 = pneg %p307
      $region74: #{balanced_bce_loss_ds.1} parent=67 // pred_check_branch
        %867 = sbr.rel (%p865) target = $region76
      $region75: #{balanced_bce_loss_ds.1} parent=67 // pred_region
        %p868 = scmp.lt.s32.totalorder %s27, 1
        %s869 = scalar_select %p868, %s27, 1
        %s870 = smul.addr %s869, 8
        %s871 = scalar_lea.vmem %s8, %s870
      $region76: #{balanced_bce_loss_ds.1} parent=67 // pred_fallthru
        _
      // Predicated region
      $region77: #{balanced_bce_loss_ds.1} parent=67 // pred_check
        %p872 = pneg %p333
      $region78: #{balanced_bce_loss_ds.1} parent=67 // pred_check_branch
        %874 = sbr.rel (%p872) target = $region80
      $region79: #{balanced_bce_loss_ds.1} parent=67 // pred_region
        %p875 = scmp.lt.s32.totalorder %s27, 1
        %s876 = scalar_select %p875, %s27, 1
        %s877 = smul.addr %s876, 8
        %s878 = scalar_lea.vmem %s9, %s877
      $region80: #{balanced_bce_loss_ds.1} parent=67 // pred_fallthru
        _
    $region68: #{balanced_bce_loss_ds.1} parent=5 // pred_fallthru
      _
  $region6: #{balanced_bce_loss_ds.1} parent=0 // loop_footer
    %s20 = sadd.s32 1, %s16
  $region7: #{balanced_bce_loss_ds.1} parent=0 // loop_footer_branch
    %15 = sbr.rel target = $region3
  $region8: #{balanced_bce_loss_ds.1} parent=0 // loop_exit
    _

</llo_original>
